<compile_context>
chip_gen: v7x
topology: tpu7x:2x2x1
jax: 0.10.0
libtpu: 0.0.40
codegen_flags: <defaults>
</compile_context>

<pallas_src>
import math

import jax
import jax.numpy as jnp
from jax.experimental import pallas as pl
from jax.experimental.pallas import tpu as pltpu

D_MODEL = 32     # embedding_dim used for the small example
MAX_LEN = 100    # PositionalEncoding max_len for the small example

_LANE = 128
_SUBLANE = 8
_TARGET_TILE_BYTES = 2 * 1024 * 1024   # ~2 MiB per tile: safe on v5e/v6e/v7x
                                        # default scoped VMEM even with
                                        # double-buffered input + output.


# --------------------------- Pallas kernel -----------------------------------

def _pos_encoding_kernel(x_ref, pe_ref, o_ref):
    """out = x + pe.  x tile: (tile_n, tile_c); pe tile: (1, tile_c).

    The add is done in f32 regardless of I/O dtype (v5e has no bf16 VPU path;
    the kernel is HBM-bound, so the casts are free filler in spare VALU slots).
    """
    x = x_ref[...].astype(jnp.float32)          # (tile_n, tile_c)
    pe = pe_ref[...]                            # (1, tile_c), f32; sublane-broadcast
    o_ref[...] = (x + pe).astype(o_ref.dtype)


# ------------------------------ helpers ---------------------------------------

def make_positional_encoding_buffer(d_model: int, max_len: int,
                                    dtype=jnp.float32) -> jnp.ndarray:
    """Equivalent of the PyTorch __init__ buffer; returns pe[0]: (max_len, d_model)."""
    position = jnp.arange(max_len, dtype=jnp.float32)[:, None]
    div_term = jnp.exp(jnp.arange(0, d_model, 2, dtype=jnp.float32)
                       * (-math.log(10000.0) / d_model))
    pe = jnp.zeros((max_len, d_model), jnp.float32)
    pe = pe.at[:, 0::2].set(jnp.sin(position * div_term))
    # Truncate the cos term so odd d_model also works (PyTorch-style guard).
    pe = pe.at[:, 1::2].set(jnp.cos(position * div_term)[:, : d_model // 2])
    return pe.astype(dtype)


def _tile_sizes(n_rows: int, n_cols: int, itemsize: int):
    """Pick a (rows, cols) VMEM tile for the lane-dense (n_rows, n_cols) add.

    cols: only tiled when divisible by 128 (BlockSpec rule), else full width.
    rows: full height if it fits, else a multiple of 8 sized to ~2 MiB/tile.
    """
    if n_cols % _LANE == 0 and n_cols * itemsize > _TARGET_TILE_BYTES:
        tile_c = max(_LANE, (_TARGET_TILE_BYTES // (itemsize * _LANE)) * _LANE)
    else:
        tile_c = n_cols
    rows_fit = max(1, _TARGET_TILE_BYTES // (tile_c * itemsize))
    if n_rows <= max(rows_fit, _SUBLANE):
        tile_n = n_rows
    else:
        tile_n = max(_SUBLANE, (rows_fit // _SUBLANE) * _SUBLANE)
    return tile_n, tile_c


# ------------------------------ wrapper ---------------------------------------

def positional_encoding_forward(x: jnp.ndarray, pe: jnp.ndarray) -> jnp.ndarray:
    """x: (N, L, D) activations (f32 or bf16); pe: (max_len, D) f32 buffer."""
    N, L, D = x.shape
    LD = L * D

    # Lane-dense flatten: (N, L, D) -> (N, L*D); pe -> (1, L*D) (== self.pe[:, :L, :]).
    x_flat = x.reshape(N, LD)
    pe_flat = pe[:L].reshape(1, LD).astype(jnp.float32)

    tile_n, tile_c = _tile_sizes(N, LD, jnp.dtype(x.dtype).itemsize)
    # Columns are the OUTER grid axis so pe's block index is constant across
    # the inner row loop (Pallas then keeps the pe slab resident, no re-DMA).
    grid = (pl.cdiv(LD, tile_c), pl.cdiv(N, tile_n))

    out_flat = pl.pallas_call(
        _pos_encoding_kernel,
        out_shape=jax.ShapeDtypeStruct((N, LD), x.dtype),
        grid=grid,
        in_specs=[
            pl.BlockSpec((tile_n, tile_c), lambda j, i: (i, j)),   # x
            pl.BlockSpec((1, tile_c), lambda j, i: (0, j)),        # pe (batch-invariant)
        ],
        out_specs=pl.BlockSpec((tile_n, tile_c), lambda j, i: (i, j)),
        # Write the result into x's buffer (donate x at the jit boundary to
        # make this a true in-place update; otherwise XLA inserts one copy).
        input_output_aliases={0: 0},
        compiler_params=pltpu.CompilerParams(
            dimension_semantics=("parallel", "parallel"),   # v7x: shard across both TCs
        ),
    )(x_flat, pe_flat)

    return out_flat.reshape(N, L, D)


# ------------------------------- main ------------------------------------------

if __name__ == "__main__":
    key = jax.random.PRNGKey(0)

    N, L, D = 2, 8, D_MODEL                  # batch=2, seq=8, hidden=32
    x = jax.random.normal(key, (N, L, D), dtype=jnp.float32)
    pe = make_positional_encoding_buffer(D, MAX_LEN)

    # Pure-JAX reference (dropout is identity in eval mode), computed first so
    # the kernel's aliased/in-place output cannot interfere with it.
    ref = x + pe[:L][None, :, :]

    fwd = jax.jit(positional_encoding_forward)
    out = fwd(x, pe)
    jax.block_until_ready(out)

    assert out.shape == (N, L, D), out.shape
    assert bool(jnp.all(jnp.isfinite(out)))
    assert bool(jnp.allclose(out, ref, atol=1e-6, rtol=1e-6))

    print("KERNEL_OK")
</pallas_src>

<mosaic_0001>
module attributes {stable_mosaic.version = 11 : i64} {
  func.func @_pos_encoding_kernel(%arg0: i32, %arg1: i32, %arg2: memref<2x256xf32, #tpu.memory_space<vmem>>, %arg3: memref<1x256xf32, #tpu.memory_space<vmem>>, %arg4: memref<2x256xf32, #tpu.memory_space<vmem>>) attributes {dimension_semantics = [#tpu.dimension_semantics<parallel>, #tpu.dimension_semantics<parallel>], iteration_bounds = array<i64: 1, 1>, scalar_prefetch = 0 : i64, scratch_operands = 0 : i64, tpu.core_type = #tpu.core_type<tc>, window_params = [{transform_indices = @transform_0, window_bounds = array<i64: 2, 256>}, {transform_indices = @transform_1, window_bounds = array<i64: 1, 256>}, {transform_indices = @transform_2, window_bounds = array<i64: 2, 256>}]} {
    %c0 = arith.constant 0 : index
    %c0_0 = arith.constant 0 : index
    %0 = vector.load %arg2[%c0, %c0_0] : memref<2x256xf32, #tpu.memory_space<vmem>>, vector<2x256xf32>
    %c0_1 = arith.constant 0 : index
    %c0_2 = arith.constant 0 : index
    %1 = vector.load %arg3[%c0_1, %c0_2] : memref<1x256xf32, #tpu.memory_space<vmem>>, vector<1x256xf32>
    %2 = vector.broadcast %1 : vector<1x256xf32> to vector<2x256xf32>
    %3 = arith.addf %0, %2 : vector<2x256xf32>
    %c0_3 = arith.constant 0 : index
    %c0_4 = arith.constant 0 : index
    %4 = vector.load %arg4[%c0_3, %c0_4] : memref<2x256xf32, #tpu.memory_space<vmem>>, vector<2x256xf32>
    tpu.vector_store %arg4[%c0_3, %c0_4], %3 {strides = array<i32>} : memref<2x256xf32, #tpu.memory_space<vmem>>, vector<2x256xf32>,
    return
  }
  func.func @transform_0(%arg0: i32, %arg1: i32) -> (i32, i32) {
    %c0_i32 = arith.constant 0 : i32
    return %arg1, %arg0 : i32, i32
  }
  func.func @transform_1(%arg0: i32, %arg1: i32) -> (i32, i32) {
    %c0_i32 = arith.constant 0 : i32
    %c0_i32_0 = arith.constant 0 : i32
    return %c0_i32, %arg0 : i32, i32
  }
  func.func @transform_2(%arg0: i32, %arg1: i32) -> (i32, i32) {
    %c0_i32 = arith.constant 0 : i32
    return %arg1, %arg0 : i32, i32
  }
}

</mosaic_0001>

<llo_original>
// kernel: positional_encoding_forward.1
$region0: #{positional_encoding_forward.1}
  #allocation0 [shape = 'u32[]', space=smem, size = 0x4, offset = 0x4, fixed_abs, tag = 'smem constant byte address 0x4 - core index']
  #allocation1 [shape = 'u32[144,128]{1,0:T(1,128)}', space=vmem, size = 0x12000, scoped, tag = 'internal scratch']
  %s0 = inlined_call_operand.vmem [shape: f32[2,256], index: 0, kind: input, shape index: {}, may-alias: {0,2}]
  %s1 = inlined_call_operand.vmem [shape: f32[1,256], index: 1, kind: input, shape index: {}]
  %s2 = inlined_call_operand.vmem [shape: f32[2,256], index: 2, kind: output, shape index: {}, may-alias: {0,2}]
  %s3 = sld [smem:[#allocation0]]
  $region18: #{positional_encoding_forward.1} parent=0
    _
  %s5 = ssub.s32 1, %s3
  %s6 = scalar_select 0, %s5, %s3
  // Predicated region
  $region2: #{positional_encoding_forward.1} parent=0 // pred_check
    _
  $region3: #{positional_encoding_forward.1} parent=0 // pred_check_branch
    %8 = sbr.rel (0) target = $region5
  $region4: #{positional_encoding_forward.1} parent=0 // pred_region
    _
  $region5: #{positional_encoding_forward.1} parent=0 // pred_fallthru
    _
  // Predicated region
  $region6: #{positional_encoding_forward.1} parent=0 // pred_check
    _
  $region7: #{positional_encoding_forward.1} parent=0 // pred_check_branch
    %10 = sbr.rel (0) target = $region9
  $region8: #{positional_encoding_forward.1} parent=0 // pred_region
    _
  $region9: #{positional_encoding_forward.1} parent=0 // pred_fallthru
    _
  %v11 = vld [vmem:[%s0] sm:$0xf]
  %v12 = vld [vmem:[%s1] sm:$0x3]
  %v14 = vlaneseq
  %v15 = vshrl.u32 %v14, 7
  %v16 = vsub.s32 0, %v15
  %v17 = vrot.slane %v12, %v16
  %v18 = vlaneseq
  %v19 = vshrl.u32 %v18, 7
  %v20 = vsub.s32 1, %v19
  %v21 = vrot.slane %v12, %v20
  %v22 = vcombine.low %v17, %v21
  %v24 = vunpack.c.l.s4 1983009808
  %v25 = vunpack.c.0.s8 %v24
  %v26 = vlaneseq
  %v27 = vshrl.u32 %v26, 7
  %v28 = vsub.s32 %v25, %v27
  %v29 = vrot.slane %v22, %v28
  %v31 = vadd.f32 %v11, %v29
  %32 = vst [vmem:[%s2] sm:$0xf] %v31
  // Predicated region
  $region10: #{positional_encoding_forward.1} parent=0 // pred_check
    _
  $region11: #{positional_encoding_forward.1} parent=0 // pred_check_branch
    %34 = sbr.rel (0) target = $region13
  $region12: #{positional_encoding_forward.1} parent=0 // pred_region
    _
  $region13: #{positional_encoding_forward.1} parent=0 // pred_fallthru
    _
  // Predicated region
  $region14: #{positional_encoding_forward.1} parent=0 // pred_check
    _
  $region15: #{positional_encoding_forward.1} parent=0 // pred_check_branch
    %36 = sbr.rel (0) target = $region17
  $region16: #{positional_encoding_forward.1} parent=0 // pred_region
    _
  $region17: #{positional_encoding_forward.1} parent=0 // pred_fallthru
    _

</llo_original>
